<compile_context>
chip_gen: v5e
topology: v5e:2x2
jax: 0.10.0
libtpu: 0.0.40
codegen_flags: <defaults>
</compile_context>

<pallas_src>
import functools

import jax
import jax.numpy as jnp
from jax.experimental import pallas as pl
from jax.experimental.pallas import tpu as pltpu


def _choose_tile_c(num_classes: int, batch: int, feat_dim: int,
                   budget_bytes: int = 16 * 1024 * 1024) -> int:
    """Largest class tile (multiple of 128) whose VMEM footprint fits budget.

    Footprint per class column (double-buffered): centers 2*D*4 bytes plus the
    two (B, TILE_C) outputs 2*2*B*4 bytes.  The 16 MiB budget is safe under the
    default scoped-VMEM limit on v5e/v6e/v7x (v7x only has 64 MiB physical).
    """
    c128 = ((num_classes + 127) // 128) * 128
    per_t = 4 * (2 * feat_dim + 4 * batch)
    fixed = 4 * (batch * feat_dim + batch) + 2 * 8 * 128 * 4
    max_t = max(128, ((budget_bytes - fixed) // per_t) // 128 * 128)
    return int(min(c128, max_t))


def _lgm_train_kernel(feat_ref, centers_ref, label_ref,
                      logits_ref, margin_ref, lik_ref, *, alpha: float):
    bsz = feat_ref.shape[0]
    tile_c = centers_ref.shape[0]
    c = pl.program_id(0)

    feat = feat_ref[...]                                  # (B, D) f32
    cent = centers_ref[...]                               # (TILE_C, D) f32

    # dist via norms - 2ab; cross term on the MXU, everything else O(B*TILE_C).
    fnorm = jnp.sum(feat * feat, axis=-1, keepdims=True)  # (B, 1)
    cnorm = jnp.sum(cent * cent, axis=-1)                 # (TILE_C,)
    cross = jax.lax.dot_general(
        feat, cent, (((1,), (1,)), ((), ())),
        preferred_element_type=jnp.float32)                # (B, TILE_C)
    dist = jnp.maximum(fnorm + cnorm[None, :] - 2.0 * cross, 0.0)

    logits = -0.5 * dist
    logits_ref[...] = logits

    # In-kernel one-hot mask for this class tile (no dense (B, C) input).
    labels = label_ref[...]                                # (B, 1) int32
    class_ids = c * tile_c + jax.lax.broadcasted_iota(
        jnp.int32, (bsz, tile_c), 1)                       # (B, TILE_C)
    mask = (class_ids == labels).astype(jnp.float32)       # (B, TILE_C)

    # margin = logits * (1 + alpha * onehot)  -- reuse logits.
    margin_ref[...] = logits + (alpha * mask) * logits

    # Per-tile partial likelihood: sum_b dist[b, label_b] / (2B), restricted to
    # labels falling in this tile.  Broadcast into an (8,128)-aligned block;
    # the wrapper sums one element per tile.
    partial = jnp.sum(dist * mask) / (2.0 * bsz)
    lik_ref[...] = jnp.full((8, 128), partial, jnp.float32)


def _lgm_eval_kernel(feat_ref, centers_ref, logits_ref):
    feat = feat_ref[...]
    cent = centers_ref[...]
    fnorm = jnp.sum(feat * feat, axis=-1, keepdims=True)
    cnorm = jnp.sum(cent * cent, axis=-1)
    cross = jax.lax.dot_general(
        feat, cent, (((1,), (1,)), ((), ())),
        preferred_element_type=jnp.float32)
    dist = jnp.maximum(fnorm + cnorm[None, :] - 2.0 * cross, 0.0)
    logits_ref[...] = -0.5 * dist


def lgm_loss(feat, centers, label=None, *, alpha=1.0, training=True):
    """Forward pass of LGMLoss. Returns (logits, margin_logits, likelihood)."""
    feat = feat.astype(jnp.float32)
    centers = centers.astype(jnp.float32)
    B, D = feat.shape
    C, D2 = centers.shape
    assert D == D2

    # Pad the class dimension so each tile is a multiple of 128 (lane dense).
    tile_c = _choose_tile_c(C, B, D)
    num_tiles = (C + tile_c - 1) // tile_c
    Cp = num_tiles * tile_c
    centers_p = jnp.pad(centers, ((0, Cp - C), (0, 0))) if Cp != C else centers

    compiler_params = pltpu.CompilerParams(dimension_semantics=("parallel",))

    if not training:
        logits_p = pl.pallas_call(
            _lgm_eval_kernel,
            out_shape=jax.ShapeDtypeStruct((B, Cp), jnp.float32),
            grid=(num_tiles,),
            in_specs=[
                pl.BlockSpec((B, D), lambda c: (0, 0)),
                pl.BlockSpec((tile_c, D), lambda c: (c, 0)),
            ],
            out_specs=pl.BlockSpec((B, tile_c), lambda c: (0, c)),
            compiler_params=compiler_params,
            cost_estimate=pl.CostEstimate(
                flops=2 * B * Cp * D,
                transcendentals=0,
                bytes_accessed=4 * (B * D + Cp * D + B * Cp)),
        )(feat, centers_p)
        return logits_p[:, :C], None, None

    label2d = label.astype(jnp.int32).reshape(B, 1)
    kernel = functools.partial(_lgm_train_kernel, alpha=float(alpha))

    logits_p, margin_p, lik_p = pl.pallas_call(
        kernel,
        out_shape=(
            jax.ShapeDtypeStruct((B, Cp), jnp.float32),
            jax.ShapeDtypeStruct((B, Cp), jnp.float32),
            jax.ShapeDtypeStruct((num_tiles * 8, 128), jnp.float32),
        ),
        grid=(num_tiles,),
        in_specs=[
            pl.BlockSpec((B, D), lambda c: (0, 0)),
            pl.BlockSpec((tile_c, D), lambda c: (c, 0)),
            pl.BlockSpec((B, 1), lambda c: (0, 0)),
        ],
        out_specs=(
            pl.BlockSpec((B, tile_c), lambda c: (0, c)),
            pl.BlockSpec((B, tile_c), lambda c: (0, c)),
            pl.BlockSpec((8, 128), lambda c: (c, 0)),
        ),
        compiler_params=compiler_params,
        cost_estimate=pl.CostEstimate(
            flops=2 * B * Cp * D,
            transcendentals=0,
            bytes_accessed=4 * (B * D + Cp * D + 2 * B * Cp
                                + num_tiles * 8 * 128 + B)),
    )(feat, centers_p, label2d)

    logits = logits_p[:, :C]
    margin_logits = margin_p[:, :C]
    likelihood = jnp.sum(lik_p[0::8, 0])        # one partial per class tile
    return logits, margin_logits, likelihood


def _reference(feat, centers, label, alpha):
    diff = feat[:, None, :] - centers[None, :, :]
    dist = jnp.sum(diff * diff, axis=-1)
    logits = -0.5 * dist
    onehot = jax.nn.one_hot(label, centers.shape[0], dtype=jnp.float32) * alpha + 1.0
    margin_logits = -0.5 * dist * onehot
    cdiff = feat - centers[label]
    likelihood = jnp.sum(cdiff * cdiff) / (2.0 * feat.shape[0])
    return logits, margin_logits, likelihood


if __name__ == "__main__":
    key = jax.random.PRNGKey(0)
    k_feat, k_cent, k_lab = jax.random.split(key, 3)

    batch = 8
    num_classes = 16
    feat_dim = 32
    alpha = 1.0

    feat = jax.random.normal(k_feat, (batch, feat_dim), dtype=jnp.float32)
    # Deterministic "parameter" init (stands in for nn.Parameter(torch.randn(...)))
    centers = jax.random.normal(k_cent, (num_classes, feat_dim), dtype=jnp.float32)
    label = jax.random.randint(k_lab, (batch,), 0, num_classes, dtype=jnp.int32)

    # Training path
    logits, margin_logits, likelihood = lgm_loss(
        feat, centers, label, alpha=alpha, training=True)
    jax.block_until_ready((logits, margin_logits, likelihood))

    # Eval path (label unused)
    logits_eval, m_none, l_none = lgm_loss(feat, centers, training=False)
    jax.block_until_ready(logits_eval)

    # Sanity check against a plain-JAX reference
    r_logits, r_margin, r_lik = _reference(feat, centers, label, alpha)
    assert jnp.allclose(logits, r_logits, atol=1e-4, rtol=1e-4)
    assert jnp.allclose(margin_logits, r_margin, atol=1e-4, rtol=1e-4)
    assert jnp.allclose(likelihood, r_lik, atol=1e-4, rtol=1e-4)
    assert jnp.allclose(logits_eval, r_logits, atol=1e-4, rtol=1e-4)
    assert m_none is None and l_none is None

    print("KERNEL_OK")
</pallas_src>

<mosaic_0001>
module attributes {stable_mosaic.version = 11 : i64} {
  func.func @_lgm_train_kernel(%arg0: i32, %arg1: memref<8x32xf32, #tpu.memory_space<vmem>>, %arg2: memref<128x32xf32, #tpu.memory_space<vmem>>, %arg3: memref<8x1xi32, #tpu.memory_space<vmem>>, %arg4: memref<8x128xf32, #tpu.memory_space<vmem>>, %arg5: memref<8x128xf32, #tpu.memory_space<vmem>>, %arg6: memref<8x128xf32, #tpu.memory_space<vmem>>) attributes {dimension_semantics = [#tpu.dimension_semantics<parallel>], iteration_bounds = array<i64: 1>, scalar_prefetch = 0 : i64, scratch_operands = 0 : i64, tpu.core_type = #tpu.core_type<tc>, window_params = [{pipeline_mode = #tpu.pipeline_mode<synchronous>, transform_indices = @transform_0, window_bounds = array<i64: 8, 32>}, {transform_indices = @transform_1, window_bounds = array<i64: 128, 32>}, {pipeline_mode = #tpu.pipeline_mode<synchronous>, transform_indices = @transform_2, window_bounds = array<i64: 8, 1>}, {transform_indices = @transform_3, window_bounds = array<i64: 8, 128>}, {transform_indices = @transform_4, window_bounds = array<i64: 8, 128>}, {transform_indices = @transform_5, window_bounds = array<i64: 8, 128>}]} {
    %c0 = arith.constant 0 : index
    %c0_0 = arith.constant 0 : index
    %0 = vector.load %arg1[%c0, %c0_0] : memref<8x32xf32, #tpu.memory_space<vmem>>, vector<8x32xf32>
    %c0_1 = arith.constant 0 : index
    %c0_2 = arith.constant 0 : index
    %1 = vector.load %arg2[%c0_1, %c0_2] : memref<128x32xf32, #tpu.memory_space<vmem>>, vector<128x32xf32>
    %2 = arith.mulf %0, %0 : vector<8x32xf32>
    %cst = arith.constant dense<0.000000e+00> : vector<8xf32>
    %3 = vector.multi_reduction <add>, %2, %cst [1] : vector<8x32xf32> to vector<8xf32>
    %4 = vector.shape_cast %3 : vector<8xf32> to vector<8x1xf32>
    %5 = arith.mulf %1, %1 : vector<128x32xf32>
    %cst_3 = arith.constant dense<0.000000e+00> : vector<128xf32>
    %6 = vector.multi_reduction <add>, %5, %cst_3 [1] : vector<128x32xf32> to vector<128xf32>
    %cst_4 = arith.constant dense<0.000000e+00> : vector<8x128xf32>
    %7 = tpu.matmul %0, %1, %cst_4 {dimension_numbers = #tpu.dot_dimension_numbers<[1], [1], [0], [0], [0, 0, 1, 0], [], []>} : vector<8x32xf32>, vector<128x32xf32>, vector<8x128xf32> -> vector<8x128xf32>
    %8 = vector.shape_cast %6 : vector<128xf32> to vector<1x128xf32>
    %9 = vector.broadcast %4 : vector<8x1xf32> to vector<8x128xf32>
    %10 = vector.broadcast %8 : vector<1x128xf32> to vector<8x128xf32>
    %11 = arith.addf %9, %10 : vector<8x128xf32>
    %cst_5 = arith.constant 2.000000e+00 : f32
    %12 = vector.broadcast %cst_5 : f32 to vector<8x128xf32>
    %13 = arith.mulf %12, %7 : vector<8x128xf32>
    %14 = arith.subf %11, %13 : vector<8x128xf32>
    %cst_6 = arith.constant 0.000000e+00 : f32
    %15 = vector.broadcast %cst_6 : f32 to vector<8x128xf32>
    %16 = arith.maximumf %14, %15 : vector<8x128xf32>
    %cst_7 = arith.constant -5.000000e-01 : f32
    %17 = vector.broadcast %cst_7 : f32 to vector<8x128xf32>
    %18 = arith.mulf %17, %16 : vector<8x128xf32>
    %c0_8 = arith.constant 0 : index
    %c0_9 = arith.constant 0 : index
    %19 = vector.load %arg4[%c0_8, %c0_9] : memref<8x128xf32, #tpu.memory_space<vmem>>, vector<8x128xf32>
    tpu.vector_store %arg4[%c0_8, %c0_9], %18 {strides = array<i32>} : memref<8x128xf32, #tpu.memory_space<vmem>>, vector<8x128xf32>,
    %c0_10 = arith.constant 0 : index
    %c0_11 = arith.constant 0 : index
    %20 = vector.load %arg3[%c0_10, %c0_11] : memref<8x1xi32, #tpu.memory_space<vmem>>, vector<8x1xi32>
    %c128_i32 = arith.constant 128 : i32
    %21 = arith.muli %arg0, %c128_i32 : i32
    %22 = tpu.iota {dimensions = array<i32: 1>} : vector<8x128xi32>
    %23 = vector.broadcast %21 : i32 to vector<8x128xi32>
    %24 = arith.addi %23, %22 : vector<8x128xi32>
    %25 = vector.broadcast %20 : vector<8x1xi32> to vector<8x128xi32>
    %26 = arith.cmpi eq, %24, %25 : vector<8x128xi32>
    %27 = arith.extui %26 : vector<8x128xi1> to vector<8x128xi32>
    %28 = arith.sitofp %27 : vector<8x128xi32> to vector<8x128xf32>
    %cst_12 = arith.constant 1.000000e+00 : f32
    %29 = vector.broadcast %cst_12 : f32 to vector<8x128xf32>
    %30 = arith.mulf %29, %28 : vector<8x128xf32>
    %31 = arith.mulf %30, %18 : vector<8x128xf32>
    %32 = arith.addf %18, %31 : vector<8x128xf32>
    %c0_13 = arith.constant 0 : index
    %c0_14 = arith.constant 0 : index
    %33 = vector.load %arg5[%c0_13, %c0_14] : memref<8x128xf32, #tpu.memory_space<vmem>>, vector<8x128xf32>
    tpu.vector_store %arg5[%c0_13, %c0_14], %32 {strides = array<i32>} : memref<8x128xf32, #tpu.memory_space<vmem>>, vector<8x128xf32>,
    %34 = arith.mulf %16, %28 : vector<8x128xf32>
    %35 = vector.shape_cast %34 : vector<8x128xf32> to vector<1x8x128xf32>
    %cst_15 = arith.constant dense<0.000000e+00> : vector<1xf32>
    %36 = vector.multi_reduction <add>, %35, %cst_15 [1, 2] : vector<1x8x128xf32> to vector<1xf32>
    %37 = vector.shape_cast %36 : vector<1xf32> to vector<1x1x1xf32>
    %38 = vector.extract %37[0, 0, 0] : f32 from vector<1x1x1xf32>
    %cst_16 = arith.constant 1.600000e+01 : f32
    %39 = arith.divf %38, %cst_16 : f32
    %40 = vector.broadcast %39 : f32 to vector<8x128xf32>
    %c0_17 = arith.constant 0 : index
    %c0_18 = arith.constant 0 : index
    %41 = vector.load %arg6[%c0_17, %c0_18] : memref<8x128xf32, #tpu.memory_space<vmem>>, vector<8x128xf32>
    tpu.vector_store %arg6[%c0_17, %c0_18], %40 {strides = array<i32>} : memref<8x128xf32, #tpu.memory_space<vmem>>, vector<8x128xf32>,
    return
  }
  func.func @transform_0(%arg0: i32) -> (i32, i32) {
    %c0_i32 = arith.constant 0 : i32
    %c0_i32_0 = arith.constant 0 : i32
    %c0_i32_1 = arith.constant 0 : i32
    return %c0_i32, %c0_i32_0 : i32, i32
  }
  func.func @transform_1(%arg0: i32) -> (i32, i32) {
    %c0_i32 = arith.constant 0 : i32
    %c0_i32_0 = arith.constant 0 : i32
    return %arg0, %c0_i32 : i32, i32
  }
  func.func @transform_2(%arg0: i32) -> (i32, i32) {
    %c0_i32 = arith.constant 0 : i32
    %c0_i32_0 = arith.constant 0 : i32
    %c0_i32_1 = arith.constant 0 : i32
    return %c0_i32, %c0_i32_0 : i32, i32
  }
  func.func @transform_3(%arg0: i32) -> (i32, i32) {
    %c0_i32 = arith.constant 0 : i32
    %c0_i32_0 = arith.constant 0 : i32
    return %c0_i32, %arg0 : i32, i32
  }
  func.func @transform_4(%arg0: i32) -> (i32, i32) {
    %c0_i32 = arith.constant 0 : i32
    %c0_i32_0 = arith.constant 0 : i32
    return %c0_i32, %arg0 : i32, i32
  }
  func.func @transform_5(%arg0: i32) -> (i32, i32) {
    %c0_i32 = arith.constant 0 : i32
    %c0_i32_0 = arith.constant 0 : i32
    return %arg0, %c0_i32 : i32, i32
  }
}

</mosaic_0001>

<llo_original>
// kernel: tpu_custom_call.1
$region0: #{tpu_custom_call.1}
  #allocation0 [shape = 'u32[]', space=smem, size = 0x4, offset = 0x4, fixed_abs, tag = 'smem constant byte address 0x4 - core index']
  #allocation1 [shape = 'u32[72,128]{1,0:T(1,128)}', space=vmem, size = 0x9000, scoped, tag = 'internal scratch']
  %s0 = inlined_call_operand.vmem [shape: f32[8,32], index: 0, kind: input, shape index: {}]
  %s1 = inlined_call_operand.vmem [shape: f32[128,32], index: 1, kind: input, shape index: {}]
  %s2 = inlined_call_operand.vmem [shape: s32[8,1], index: 2, kind: input, shape index: {}]
  %s3 = inlined_call_operand.hbm [shape: f32[8,128], index: 3, kind: output, shape index: {0}]
  %s4 = inlined_call_operand.hbm [shape: f32[8,128], index: 4, kind: output, shape index: {1}]
  %s5 = inlined_call_operand.hbm [shape: f32[8,128], index: 5, kind: output, shape index: {2}]
  %6 = xla_tuple %s3, %s4, %s5
  %s7 = sld [smem:[#allocation0]]
  $region38: #{tpu_custom_call.1} parent=0
    _
  %s9 = ssub.s32 1, %s7
  %s10 = scalar_select 0, %s9, %s7
  $region1: #{tpu_custom_call.1} parent=0
    #allocation2 [shape = 'u8[4096]{0}', space=vmem, size = 0x1000, scoped, tag = 'output window, operand 0, single buffered']
    #allocation3 [shape = 's32[1]{0}', space=sflag, size = 0x4, scoped, tag = 'scoped memory for tpu_custom_call.1']
    #allocation4 [shape = 'u8[4096]{0}', space=vmem, size = 0x1000, scoped, tag = 'output window, operand 1, single buffered']
    #allocation5 [shape = 's32[1]{0}', space=sflag, size = 0x4, scoped, tag = 'scoped memory for tpu_custom_call.1']
    #allocation6 [shape = 'u8[4096]{0}', space=vmem, size = 0x1000, scoped, tag = 'output window, operand 2, single buffered']
    %11 = vsyncpa [#allocation3], 0
    %12 = vsyncpa [#allocation5], 0
    // Predicated region
    $region2: #{tpu_custom_call.1} parent=1 // pred_check
      _
    $region3: #{tpu_custom_call.1} parent=1 // pred_check_branch
      %14 = sbr.rel (0) target = $region5
    $region4: #{tpu_custom_call.1} parent=1 // pred_region
      _
    $region5: #{tpu_custom_call.1} parent=1 // pred_fallthru
      _
    // Predicated region
    $region6: #{tpu_custom_call.1} parent=1 // pred_check
      _
    $region7: #{tpu_custom_call.1} parent=1 // pred_check_branch
      %16 = sbr.rel (0) target = $region9
    $region8: #{tpu_custom_call.1} parent=1 // pred_region
      _
    $region9: #{tpu_custom_call.1} parent=1 // pred_fallthru
      _
    // Predicated region
    $region10: #{tpu_custom_call.1} parent=1 // pred_check
      _
    $region11: #{tpu_custom_call.1} parent=1 // pred_check_branch
      %18 = sbr.rel (0) target = $region13
    $region12: #{tpu_custom_call.1} parent=1 // pred_region
      _
    $region13: #{tpu_custom_call.1} parent=1 // pred_fallthru
      _
    %v19 = vld [vmem:[%s0] sm:$0xff]
    %v20 = vld [vmem:[%s1] sm:$0xff]
    %v21 = vld [vmem:[%s1 + $0x8] sm:$0xff]
    %v22 = vld [vmem:[%s1 + $0x10] sm:$0xff]
    %v23 = vld [vmem:[%s1 + $0x18] sm:$0xff]
    %v24 = vld [vmem:[%s1 + $0x20] sm:$0xff]
    %v25 = vld [vmem:[%s1 + $0x28] sm:$0xff]
    %v26 = vld [vmem:[%s1 + $0x30] sm:$0xff]
    %v27 = vld [vmem:[%s1 + $0x38] sm:$0xff]
    %v28 = vld [vmem:[%s1 + $0x40] sm:$0xff]
    %v29 = vld [vmem:[%s1 + $0x48] sm:$0xff]
    %v30 = vld [vmem:[%s1 + $0x50] sm:$0xff]
    %v31 = vld [vmem:[%s1 + $0x58] sm:$0xff]
    %v32 = vld [vmem:[%s1 + $0x60] sm:$0xff]
    %v33 = vld [vmem:[%s1 + $0x68] sm:$0xff]
    %v34 = vld [vmem:[%s1 + $0x70] sm:$0xff]
    %v35 = vld [vmem:[%s1 + $0x78] sm:$0xff]
    %v36 = vmul.f32 %v19, %v19
    %vm37 = vcmask 261120
    %v38 = vsel %vm37, %v36, 0.0
    %39 = vadd.xlane.f32.xlu0 %v38
    %v40 = vpop.xlane.xlu0 %39
    %v41 = vmul.f32 %v20, %v20
    %v42 = vmul.f32 %v21, %v21
    %v43 = vmul.f32 %v22, %v22
    %v44 = vmul.f32 %v23, %v23
    %v45 = vmul.f32 %v24, %v24
    %v46 = vmul.f32 %v25, %v25
    %v47 = vmul.f32 %v26, %v26
    %v48 = vmul.f32 %v27, %v27
    %v49 = vmul.f32 %v28, %v28
    %v50 = vmul.f32 %v29, %v29
    %v51 = vmul.f32 %v30, %v30
    %v52 = vmul.f32 %v31, %v31
    %v53 = vmul.f32 %v32, %v32
    %v54 = vmul.f32 %v33, %v33
    %v55 = vmul.f32 %v34, %v34
    %v56 = vmul.f32 %v35, %v35
    %v57 = vsel %vm37, %v41, 0.0
    %58 = vadd.xlane.f32.xlu0 %v57
    %v59 = vpop.xlane.xlu0 %58
    %v60 = vsel %vm37, %v42, 0.0
    %61 = vadd.xlane.f32.xlu0 %v60
    %v62 = vpop.xlane.xlu0 %61
    %v63 = vsel %vm37, %v43, 0.0
    %64 = vadd.xlane.f32.xlu0 %v63
    %v65 = vpop.xlane.xlu0 %64
    %v66 = vsel %vm37, %v44, 0.0
    %67 = vadd.xlane.f32.xlu0 %v66
    %v68 = vpop.xlane.xlu0 %67
    %v69 = vsel %vm37, %v45, 0.0
    %70 = vadd.xlane.f32.xlu0 %v69
    %v71 = vpop.xlane.xlu0 %70
    %v72 = vsel %vm37, %v46, 0.0
    %73 = vadd.xlane.f32.xlu0 %v72
    %v74 = vpop.xlane.xlu0 %73
    %v75 = vsel %vm37, %v47, 0.0
    %76 = vadd.xlane.f32.xlu0 %v75
    %v77 = vpop.xlane.xlu0 %76
    %v78 = vsel %vm37, %v48, 0.0
    %79 = vadd.xlane.f32.xlu0 %v78
    %v80 = vpop.xlane.xlu0 %79
    %v81 = vsel %vm37, %v49, 0.0
    %82 = vadd.xlane.f32.xlu0 %v81
    %v83 = vpop.xlane.xlu0 %82
    %v84 = vsel %vm37, %v50, 0.0
    %85 = vadd.xlane.f32.xlu0 %v84
    %v86 = vpop.xlane.xlu0 %85
    %v87 = vsel %vm37, %v51, 0.0
    %88 = vadd.xlane.f32.xlu0 %v87
    %v89 = vpop.xlane.xlu0 %88
    %v90 = vsel %vm37, %v52, 0.0
    %91 = vadd.xlane.f32.xlu0 %v90
    %v92 = vpop.xlane.xlu0 %91
    %v93 = vsel %vm37, %v53, 0.0
    %94 = vadd.xlane.f32.xlu0 %v93
    %v95 = vpop.xlane.xlu0 %94
    %v96 = vsel %vm37, %v54, 0.0
    %97 = vadd.xlane.f32.xlu0 %v96
    %v98 = vpop.xlane.xlu0 %97
    %v99 = vsel %vm37, %v55, 0.0
    %100 = vadd.xlane.f32.xlu0 %v99
    %v101 = vpop.xlane.xlu0 %100
    %v102 = vsel %vm37, %v56, 0.0
    %103 = vadd.xlane.f32.xlu0 %v102
    %v104 = vpop.xlane.xlu0 %103
    %v106 = vsel %vm37, %v19, 0
    %v109 = vsel %vm37, %v20, 0
    %v112 = vsel %vm37, %v21, 0
    %v115 = vsel %vm37, %v22, 0
    %v118 = vsel %vm37, %v23, 0
    %v121 = vsel %vm37, %v24, 0
    %v124 = vsel %vm37, %v25, 0
    %v127 = vsel %vm37, %v26, 0
    %v130 = vsel %vm37, %v27, 0
    %v133 = vsel %vm37, %v28, 0
    %v136 = vsel %vm37, %v29, 0
    %v139 = vsel %vm37, %v30, 0
    %v142 = vsel %vm37, %v31, 0
    %v145 = vsel %vm37, %v32, 0
    %v148 = vsel %vm37, %v33, 0
    %v151 = vsel %vm37, %v34, 0
    %v154 = vsel %vm37, %v35, 0
    %156 = vmatpush.xpose.msra.mxu0 %v154
    %157 = vmatpush.xpose.msra.mxu0 %v151
    %158 = vmatpush.xpose.msra.mxu0 %v148
    %159 = vmatpush.xpose.msra.mxu0 %v145
    %160 = vmatpush.xpose.msra.mxu0 %v142
    %161 = vmatpush.xpose.msra.mxu0 %v139
    %162 = vmatpush.xpose.msra.mxu0 %v136
    %163 = vmatpush.xpose.msra.mxu0 %v133
    %164 = vmatpush.xpose.msra.mxu0 %v130
    %165 = vmatpush.xpose.msra.mxu0 %v127
    %166 = vmatpush.xpose.msra.mxu0 %v124
    %167 = vmatpush.xpose.msra.mxu0 %v121
    %168 = vmatpush.xpose.msra.mxu0 %v118
    %169 = vmatpush.xpose.msra.mxu0 %v115
    %170 = vmatpush.xpose.msra.mxu0 %v112
    %171 = vmatpush.xpose.msra.mxu0 %v109
    %172 = vmatmul.f32.gmra.mxu0 %v106
    %v173 = vpop.f32.mrf.mxu0
    %v174 = vadd.f32 0.0, %v173
    %175 = vdwg.mxu0
    %v192 = vlaneseq
    %v193 = vand.u32 %v192, 127
    %v194 = vperm.slane %v59, %v193
    %v195 = vadd.s32 %v193, 4294967288
    %v196 = vperm.slane %v62, %v195
    %vm197 = vcmask 130112
    %v198 = vsel %vm197, %v196, %v194
    %v199 = vadd.s32 %v193, 4294967280
    %v200 = vperm.slane %v65, %v199
    %vm201 = vcmask 195712
    %v202 = vsel %vm201, %v200, %v198
    %v203 = vadd.s32 %v193, 4294967272
    %v204 = vperm.slane %v68, %v203
    %vm205 = vcmask 261312
    %v206 = vsel %vm205, %v204, %v202
    %v207 = vadd.s32 %v193, 4294967264
    %v208 = vperm.slane %v71, %v207
    %vm209 = vcmask 326912
    %v210 = vsel %vm209, %v208, %v206
    %v211 = vadd.s32 %v193, 4294967256
    %v212 = vperm.slane %v74, %v211
    %vm213 = vcmask 392512
    %v214 = vsel %vm213, %v212, %v210
    %v215 = vadd.s32 %v193, 4294967248
    %v216 = vperm.slane %v77, %v215
    %vm217 = vcmask 458112
    %v218 = vsel %vm217, %v216, %v214
    %v219 = vadd.s32 %v193, 4294967240
    %v220 = vperm.slane %v80, %v219
    %vm221 = vcmask 523712
    %v222 = vsel %vm221, %v220, %v218
    %v223 = vadd.s32 %v193, 4294967232
    %v224 = vperm.slane %v83, %v223
    %vm225 = vcmask 589312
    %v226 = vsel %vm225, %v224, %v222
    %v227 = vadd.s32 %v193, 4294967224
    %v228 = vperm.slane %v86, %v227
    %vm229 = vcmask 654912
    %v230 = vsel %vm229, %v228, %v226
    %v231 = vadd.s32 %v193, 4294967216
    %v232 = vperm.slane %v89, %v231
    %vm233 = vcmask 720512
    %v234 = vsel %vm233, %v232, %v230
    %v235 = vadd.s32 %v193, 4294967208
    %v236 = vperm.slane %v92, %v235
    %vm237 = vcmask 786112
    %v238 = vsel %vm237, %v236, %v234
    %v239 = vadd.s32 %v193, 4294967200
    %v240 = vperm.slane %v95, %v239
    %vm241 = vcmask 851712
    %v242 = vsel %vm241, %v240, %v238
    %v243 = vadd.s32 %v193, 4294967192
    %v244 = vperm.slane %v98, %v243
    %vm245 = vcmask 917312
    %v246 = vsel %vm245, %v244, %v242
    %v247 = vadd.s32 %v193, 4294967184
    %v248 = vperm.slane %v101, %v247
    %vm249 = vcmask 982912
    %v250 = vsel %vm249, %v248, %v246
    %v251 = vadd.s32 %v193, 4294967176
    %v252 = vperm.slane %v104, %v251
    %vm253 = vcmask 1048512
    %v254 = vsel %vm253, %v252, %v250
    %vm255 = vcmask 1042434
    %v256 = vsel %vm255, %v254, %v254
    %vm257 = vcmask 1043459
    %v258 = vsel %vm257, %v254, %v256
    %vm259 = vcmask 1044484
    %v260 = vsel %vm259, %v254, %v258
    %vm261 = vcmask 1045509
    %v262 = vsel %vm261, %v254, %v260
    %vm263 = vcmask 1046534
    %v264 = vsel %vm263, %v254, %v262
    %vm265 = vcmask 1047559
    %v266 = vsel %vm265, %v254, %v264
    %v268 = vadd.f32 %v40, %v266
    %v269 = vmul.f32 %v174, 2.0
    %v270 = vsub.f32 %v268, %v269
    %v271 = vmax.f32 %v270, 0.0
    %v272 = vmul.f32 %v271, -0.5
    %273 = vst [vmem:[#allocation2] sm:$0xff] %v272
    %v274 = vld [vmem:[%s2] sm:$0xff]
    %s275 = smul.u32 0, 128
    %v276 = vstv %s275
    %v277 = vadd.s32 %v276, %v193
    %278 = vset.pattern.permute.xlu0 0
    %279 = vperm.xlu0 %278, %v274
    %v280 = vpop.permute.xlu0 %279
    %vm281 = vcmp.eq.s32.totalorder %v277, %v280
    %v282 = vsel %vm281, 1, 0
    %v283 = vcvt.s32.f32 %v282
    %v284 = vmul.f32 %v283, %v272
    %v285 = vadd.f32 %v272, %v284
    %286 = vst [vmem:[#allocation4] sm:$0xff] %v285
    %v287 = vmul.f32 %v271, %v283
    %288 = vadd.xlane.f32.xlu0 %v287
    %v289 = vpop.xlane.xlu0 %288
    %v290 = vrot.slane %v289, 4
    %v291 = vadd.f32 %v289, %v290
    %v292 = vrot.slane %v291, 2
    %v293 = vadd.f32 %v291, %v292
    %v294 = vrot.slane %v293, 1
    %v295 = vadd.f32 %v293, %v294
    %s296 = vtos %v295
    %v297 = vrcp.pop 16.0
    %v298 = vmul.f32 16.0, %v297
    %v299 = vsub.f32 1.0, %v298
    %v300 = vmul.f32 %v297, %v299
    %v301 = vadd.f32 %v297, %v300
    %vm302 = vweird.f32 %v297
    %v303 = vsel %vm302, %v297, %v301
    %s304 = vtos %v303
    %s305 = smul.f32 %s296, %s304
    %v306 = vstv %s305
    %307 = vst [vmem:[#allocation6] sm:$0xff] %v306
    // Predicated region
    $region14: #{tpu_custom_call.1} parent=1 // pred_check
      _
    $region15: #{tpu_custom_call.1} parent=1 // pred_check_branch
      %309 = sbr.rel (0) target = $region17
    $region16: #{tpu_custom_call.1} parent=1 // pred_region
      %311 = vsyncadd [#allocation3], 0
      %s313 = sshll.u32 [#allocation2], 4
      %s314 = int_to_ptr.vmem [resolvable:$true] %s313
      %s315 = sshll.u32 %s3, 4
      %s316 = int_to_ptr.hbm [resolvable:$true] %s315
      %318 = dma.vmem_to_hbm [thread:$0]  %s314, 128, %s316, [#allocation3]
    $region17: #{tpu_custom_call.1} parent=1 // pred_fallthru
      _
    // Predicated region
    $region18: #{tpu_custom_call.1} parent=1 // pred_check
      _
    $region19: #{tpu_custom_call.1} parent=1 // pred_check_branch
      %320 = sbr.rel (0) target = $region21
    $region20: #{tpu_custom_call.1} parent=1 // pred_region
      %322 = vsyncadd [#allocation5], 0
      %s324 = sshll.u32 [#allocation4], 4
      %s325 = int_to_ptr.vmem [resolvable:$true] %s324
      %s326 = sshll.u32 %s4, 4
      %s327 = int_to_ptr.hbm [resolvable:$true] %s326
      %329 = dma.vmem_to_hbm [thread:$0]  %s325, 128, %s327, [#allocation5]
    $region21: #{tpu_custom_call.1} parent=1 // pred_fallthru
      _
    // Predicated region
    $region22: #{tpu_custom_call.1} parent=1 // pred_check
      _
    $region23: #{tpu_custom_call.1} parent=1 // pred_check_branch
      %331 = sbr.rel (0) target = $region25
    $region24: #{tpu_custom_call.1} parent=1 // pred_region
      %333 = vsyncadd [#allocation5], 0
      %s335 = sshll.u32 [#allocation6], 4
      %s336 = int_to_ptr.vmem [resolvable:$true] %s335
      %s337 = sshll.u32 %s5, 4
      %s338 = int_to_ptr.hbm [resolvable:$true] %s337
      %340 = dma.vmem_to_hbm [thread:$0]  %s336, 128, %s338, [#allocation5]
    $region25: #{tpu_custom_call.1} parent=1 // pred_fallthru
      _
    // Predicated region
    $region26: #{tpu_custom_call.1} parent=1 // pred_check
      _
    $region27: #{tpu_custom_call.1} parent=1 // pred_check_branch
      %342 = sbr.rel (0) target = $region29
    $region28: #{tpu_custom_call.1} parent=1 // pred_region
      %344 = dma.done [#allocation3], 128
    $region29: #{tpu_custom_call.1} parent=1 // pred_fallthru
      _
    // Predicated region
    $region30: #{tpu_custom_call.1} parent=1 // pred_check
      _
    $region31: #{tpu_custom_call.1} parent=1 // pred_check_branch
      %346 = sbr.rel (0) target = $region33
    $region32: #{tpu_custom_call.1} parent=1 // pred_region
      %348 = dma.done [#allocation5], 128
    $region33: #{tpu_custom_call.1} parent=1 // pred_fallthru
      _
    // Predicated region
    $region34: #{tpu_custom_call.1} parent=1 // pred_check
      _
    $region35: #{tpu_custom_call.1} parent=1 // pred_check_branch
      %350 = sbr.rel (0) target = $region37
    $region36: #{tpu_custom_call.1} parent=1 // pred_region
      %352 = dma.done [#allocation5], 128
    $region37: #{tpu_custom_call.1} parent=1 // pred_fallthru
      _
    %353 = vsyncpa [#allocation3], 1
    %354 = vsyncpa [#allocation5], 1

</llo_original>
